<compile_context>
chip_gen: v7x
topology: tpu7x:2x2x1
jax: 0.10.0
libtpu: 0.0.40
codegen_flags: <defaults>
</compile_context>

<pallas_src>
import jax
import jax.numpy as jnp
import numpy as np
from jax.experimental import pallas as pl
from jax.experimental.pallas import tpu as pltpu

EPS = 1e-5


def saf_kernel(x_ref, w1_ref, b1_ref, gamma_ref, beta_ref, w2_ref, b2_ref, o_ref):
    # x_ref:     (B, S, E)   activations, feature dim on lanes
    # w1_ref:    (E, H)      b1_ref: (1, H)
    # gamma_ref: (S, 1)      beta_ref: (S, 1)   (BN affine, channel dim = S)
    # w2_ref:    (H, O)      b2_ref: (1, O)
    # o_ref:     (B, S, O)
    B, S, _ = x_ref.shape
    H = w1_ref.shape[1]

    w1 = w1_ref[...]
    b1 = b1_ref[...]
    inv_n = 1.0 / (B * H)

    # Pass 1: hidden = relu(x @ W1 + b1) per batch slice (dropout == identity),
    # accumulating per-channel (per-S) sum and sum-of-squares for BatchNorm.
    # Each iteration is a plain 2-D matmul on an (S, E) slab -- no reshapes.
    hs = []
    ch_sum = jnp.zeros((S, 1), dtype=jnp.float32)
    ch_sumsq = jnp.zeros((S, 1), dtype=jnp.float32)
    for b in range(B):
        h = jnp.dot(x_ref[b], w1, preferred_element_type=jnp.float32) + b1
        h = jnp.maximum(h, 0.0)
        hs.append(h)
        ch_sum = ch_sum + jnp.sum(h, axis=1, keepdims=True)        # XLU lane reduce
        ch_sumsq = ch_sumsq + jnp.sum(h * h, axis=1, keepdims=True)

    # BatchNorm1d(S) training-mode stats, one-pass form (biased variance).
    mean = ch_sum * inv_n                               # (S, 1)
    var = ch_sumsq * inv_n - mean * mean                # (S, 1)
    a = gamma_ref[...] * jax.lax.rsqrt(var + EPS)       # per-channel scale
    c = beta_ref[...] - a * mean                        # per-channel shift

    # Fold the BN affine through the second Linear:
    #   ((a*h + c) @ W2 + b2) == a*(h @ W2) + c*colsum(W2) + b2
    w2 = w2_ref[...]
    shift = c * jnp.sum(w2, axis=0, keepdims=True) + b2_ref[...]   # (S, O)

    # Pass 2: output = a * (h @ W2) + shift (second dropout == identity).
    for b in range(B):
        y = jnp.dot(hs[b], w2, preferred_element_type=jnp.float32)  # (S, O)
        o_ref[b] = a * y + shift


def self_attention_forward_net(x, w1, b1, gamma, beta, w2, b2):
    # Single instance -> grid-less call, whole arrays resident in VMEM.
    # TODO(synk): if the surrounding model evaluates many independent instances
    # per step, batch them on a leading "parallel" grid axis so one pallas_call
    # amortizes launch cost (and uses both TensorCores on v7x).
    B, S, _ = x.shape
    O = w2.shape[1]
    vmem = pl.BlockSpec(memory_space=pltpu.MemorySpace.VMEM)
    return pl.pallas_call(
        saf_kernel,
        out_shape=jax.ShapeDtypeStruct((B, S, O), jnp.float32),
        in_specs=[vmem] * 7,
        out_specs=vmem,
    )(x, w1, b1, gamma, beta, w2, b2)


def reference(x, w1, b1, gamma, beta, w2, b2):
    # Pure-JAX reference with canonical (two-pass) BatchNorm formulation.
    h = jnp.einsum("bse,eh->bsh", x, w1) + b1[0]
    h = jnp.maximum(h, 0.0)
    mean = jnp.mean(h, axis=(0, 2), keepdims=True)
    var = jnp.mean((h - mean) ** 2, axis=(0, 2), keepdims=True)
    hn = (h - mean) * jax.lax.rsqrt(var + EPS)
    hn = hn * gamma.reshape(1, -1, 1) + beta.reshape(1, -1, 1)
    return jnp.einsum("bsh,ho->bso", hn, w2) + b2[0]


if __name__ == "__main__":
    # Module hyper-params: embedding_size=32, hidden_size=64, output_size=16, p=0.1.
    # BatchNorm1d(20) fixes the sequence (channel) length at 20.
    B, S, E, H, O = 4, 20, 32, 64, 16

    key = jax.random.PRNGKey(0)
    kx, kw1, kb1, kw2, kb2, kg, kbeta = jax.random.split(key, 7)

    x = jax.random.normal(kx, (B, S, E), dtype=jnp.float32)

    # PyTorch Linear stores (out, in); weights are pre-transposed so the kernel
    # computes x @ W.
    w1 = jax.random.normal(kw1, (E, H), dtype=jnp.float32) * (1.0 / np.sqrt(E))
    b1 = jax.random.normal(kb1, (1, H), dtype=jnp.float32) * 0.1
    w2 = jax.random.normal(kw2, (H, O), dtype=jnp.float32) * (1.0 / np.sqrt(H))
    b2 = jax.random.normal(kb2, (1, O), dtype=jnp.float32) * 0.1
    # BatchNorm affine params (PyTorch default gamma=1, beta=0; perturbed so the
    # affine path is exercised).
    gamma = 1.0 + 0.1 * jax.random.normal(kg, (S, 1), dtype=jnp.float32)
    beta = 0.1 * jax.random.normal(kbeta, (S, 1), dtype=jnp.float32)

    out = jax.block_until_ready(
        self_attention_forward_net(x, w1, b1, gamma, beta, w2, b2))
    ref = jax.block_until_ready(reference(x, w1, b1, gamma, beta, w2, b2))

    # atol slightly relaxed (2e-5) because the kernel uses one-pass variance
    # (E[x^2]-mean^2) and the folded post-matmul affine, which round differently
    # from the canonical two-pass reference at the ~1e-6 level.
    np.testing.assert_allclose(np.asarray(out), np.asarray(ref), rtol=1e-5, atol=2e-5)

    # TODO(synk): training-mode dropout (stochastic masking) is omitted; the
    # kernel implements eval-mode (identity) dropout semantics.
    print("KERNEL_OK")
</pallas_src>

<mosaic_0001>
module attributes {stable_mosaic.version = 11 : i64} {
  func.func @saf_kernel(%arg0: memref<4x20x32xf32, #tpu.memory_space<vmem>>, %arg1: memref<32x64xf32, #tpu.memory_space<vmem>>, %arg2: memref<1x64xf32, #tpu.memory_space<vmem>>, %arg3: memref<20x1xf32, #tpu.memory_space<vmem>>, %arg4: memref<20x1xf32, #tpu.memory_space<vmem>>, %arg5: memref<64x16xf32, #tpu.memory_space<vmem>>, %arg6: memref<1x16xf32, #tpu.memory_space<vmem>>, %arg7: memref<4x20x16xf32, #tpu.memory_space<vmem>>) attributes {dimension_semantics = [], scalar_prefetch = 0 : i64, scratch_operands = 0 : i64, tpu.core_type = #tpu.core_type<tc>} {
    %c0 = arith.constant 0 : index
    %c0_0 = arith.constant 0 : index
    %0 = vector.load %arg1[%c0, %c0_0] : memref<32x64xf32, #tpu.memory_space<vmem>>, vector<32x64xf32>
    %c0_1 = arith.constant 0 : index
    %c0_2 = arith.constant 0 : index
    %1 = vector.load %arg2[%c0_1, %c0_2] : memref<1x64xf32, #tpu.memory_space<vmem>>, vector<1x64xf32>
    %cst = arith.constant 0.000000e+00 : f32
    %2 = vector.broadcast %cst : f32 to vector<20x1xf32>
    %cst_3 = arith.constant 0.000000e+00 : f32
    %3 = vector.broadcast %cst_3 : f32 to vector<20x1xf32>
    %c0_4 = arith.constant 0 : index
    %c0_5 = arith.constant 0 : index
    %c0_6 = arith.constant 0 : index
    %4 = vector.load %arg0[%c0_4, %c0_5, %c0_6] : memref<4x20x32xf32, #tpu.memory_space<vmem>>, vector<1x20x32xf32>
    %5 = vector.shape_cast %4 : vector<1x20x32xf32> to vector<20x32xf32>
    %cst_7 = arith.constant dense<0.000000e+00> : vector<20x64xf32>
    %6 = tpu.matmul %5, %0, %cst_7 {dimension_numbers = #tpu.dot_dimension_numbers<[1], [0], [0], [1], [0, 0, 1, 1], [], []>} : vector<20x32xf32>, vector<32x64xf32>, vector<20x64xf32> -> vector<20x64xf32>
    %7 = vector.broadcast %1 : vector<1x64xf32> to vector<20x64xf32>
    %8 = arith.addf %6, %7 : vector<20x64xf32>
    %cst_8 = arith.constant 0.000000e+00 : f32
    %9 = vector.broadcast %cst_8 : f32 to vector<20x64xf32>
    %10 = arith.maximumf %8, %9 : vector<20x64xf32>
    %cst_9 = arith.constant dense<0.000000e+00> : vector<20xf32>
    %11 = vector.multi_reduction <add>, %10, %cst_9 [1] : vector<20x64xf32> to vector<20xf32>
    %12 = vector.shape_cast %11 : vector<20xf32> to vector<20x1xf32>
    %13 = arith.addf %2, %12 : vector<20x1xf32>
    %14 = arith.mulf %10, %10 : vector<20x64xf32>
    %cst_10 = arith.constant dense<0.000000e+00> : vector<20xf32>
    %15 = vector.multi_reduction <add>, %14, %cst_10 [1] : vector<20x64xf32> to vector<20xf32>
    %16 = vector.shape_cast %15 : vector<20xf32> to vector<20x1xf32>
    %17 = arith.addf %3, %16 : vector<20x1xf32>
    %c1 = arith.constant 1 : index
    %c0_11 = arith.constant 0 : index
    %c0_12 = arith.constant 0 : index
    %18 = vector.load %arg0[%c1, %c0_11, %c0_12] : memref<4x20x32xf32, #tpu.memory_space<vmem>>, vector<1x20x32xf32>
    %19 = vector.shape_cast %18 : vector<1x20x32xf32> to vector<20x32xf32>
    %cst_13 = arith.constant dense<0.000000e+00> : vector<20x64xf32>
    %20 = tpu.matmul %19, %0, %cst_13 {dimension_numbers = #tpu.dot_dimension_numbers<[1], [0], [0], [1], [0, 0, 1, 1], [], []>} : vector<20x32xf32>, vector<32x64xf32>, vector<20x64xf32> -> vector<20x64xf32>
    %21 = vector.broadcast %1 : vector<1x64xf32> to vector<20x64xf32>
    %22 = arith.addf %20, %21 : vector<20x64xf32>
    %cst_14 = arith.constant 0.000000e+00 : f32
    %23 = vector.broadcast %cst_14 : f32 to vector<20x64xf32>
    %24 = arith.maximumf %22, %23 : vector<20x64xf32>
    %cst_15 = arith.constant dense<0.000000e+00> : vector<20xf32>
    %25 = vector.multi_reduction <add>, %24, %cst_15 [1] : vector<20x64xf32> to vector<20xf32>
    %26 = vector.shape_cast %25 : vector<20xf32> to vector<20x1xf32>
    %27 = arith.addf %13, %26 : vector<20x1xf32>
    %28 = arith.mulf %24, %24 : vector<20x64xf32>
    %cst_16 = arith.constant dense<0.000000e+00> : vector<20xf32>
    %29 = vector.multi_reduction <add>, %28, %cst_16 [1] : vector<20x64xf32> to vector<20xf32>
    %30 = vector.shape_cast %29 : vector<20xf32> to vector<20x1xf32>
    %31 = arith.addf %17, %30 : vector<20x1xf32>
    %c2 = arith.constant 2 : index
    %c0_17 = arith.constant 0 : index
    %c0_18 = arith.constant 0 : index
    %32 = vector.load %arg0[%c2, %c0_17, %c0_18] : memref<4x20x32xf32, #tpu.memory_space<vmem>>, vector<1x20x32xf32>
    %33 = vector.shape_cast %32 : vector<1x20x32xf32> to vector<20x32xf32>
    %cst_19 = arith.constant dense<0.000000e+00> : vector<20x64xf32>
    %34 = tpu.matmul %33, %0, %cst_19 {dimension_numbers = #tpu.dot_dimension_numbers<[1], [0], [0], [1], [0, 0, 1, 1], [], []>} : vector<20x32xf32>, vector<32x64xf32>, vector<20x64xf32> -> vector<20x64xf32>
    %35 = vector.broadcast %1 : vector<1x64xf32> to vector<20x64xf32>
    %36 = arith.addf %34, %35 : vector<20x64xf32>
    %cst_20 = arith.constant 0.000000e+00 : f32
    %37 = vector.broadcast %cst_20 : f32 to vector<20x64xf32>
    %38 = arith.maximumf %36, %37 : vector<20x64xf32>
    %cst_21 = arith.constant dense<0.000000e+00> : vector<20xf32>
    %39 = vector.multi_reduction <add>, %38, %cst_21 [1] : vector<20x64xf32> to vector<20xf32>
    %40 = vector.shape_cast %39 : vector<20xf32> to vector<20x1xf32>
    %41 = arith.addf %27, %40 : vector<20x1xf32>
    %42 = arith.mulf %38, %38 : vector<20x64xf32>
    %cst_22 = arith.constant dense<0.000000e+00> : vector<20xf32>
    %43 = vector.multi_reduction <add>, %42, %cst_22 [1] : vector<20x64xf32> to vector<20xf32>
    %44 = vector.shape_cast %43 : vector<20xf32> to vector<20x1xf32>
    %45 = arith.addf %31, %44 : vector<20x1xf32>
    %c3 = arith.constant 3 : index
    %c0_23 = arith.constant 0 : index
    %c0_24 = arith.constant 0 : index
    %46 = vector.load %arg0[%c3, %c0_23, %c0_24] : memref<4x20x32xf32, #tpu.memory_space<vmem>>, vector<1x20x32xf32>
    %47 = vector.shape_cast %46 : vector<1x20x32xf32> to vector<20x32xf32>
    %cst_25 = arith.constant dense<0.000000e+00> : vector<20x64xf32>
    %48 = tpu.matmul %47, %0, %cst_25 {dimension_numbers = #tpu.dot_dimension_numbers<[1], [0], [0], [1], [0, 0, 1, 1], [], []>} : vector<20x32xf32>, vector<32x64xf32>, vector<20x64xf32> -> vector<20x64xf32>
    %49 = vector.broadcast %1 : vector<1x64xf32> to vector<20x64xf32>
    %50 = arith.addf %48, %49 : vector<20x64xf32>
    %cst_26 = arith.constant 0.000000e+00 : f32
    %51 = vector.broadcast %cst_26 : f32 to vector<20x64xf32>
    %52 = arith.maximumf %50, %51 : vector<20x64xf32>
    %cst_27 = arith.constant dense<0.000000e+00> : vector<20xf32>
    %53 = vector.multi_reduction <add>, %52, %cst_27 [1] : vector<20x64xf32> to vector<20xf32>
    %54 = vector.shape_cast %53 : vector<20xf32> to vector<20x1xf32>
    %55 = arith.addf %41, %54 : vector<20x1xf32>
    %56 = arith.mulf %52, %52 : vector<20x64xf32>
    %cst_28 = arith.constant dense<0.000000e+00> : vector<20xf32>
    %57 = vector.multi_reduction <add>, %56, %cst_28 [1] : vector<20x64xf32> to vector<20xf32>
    %58 = vector.shape_cast %57 : vector<20xf32> to vector<20x1xf32>
    %59 = arith.addf %45, %58 : vector<20x1xf32>
    %cst_29 = arith.constant 3.906250e-03 : f32
    %60 = vector.broadcast %cst_29 : f32 to vector<20x1xf32>
    %61 = arith.mulf %55, %60 : vector<20x1xf32>
    %cst_30 = arith.constant 3.906250e-03 : f32
    %62 = vector.broadcast %cst_30 : f32 to vector<20x1xf32>
    %63 = arith.mulf %59, %62 : vector<20x1xf32>
    %64 = arith.mulf %61, %61 : vector<20x1xf32>
    %65 = arith.subf %63, %64 : vector<20x1xf32>
    %c0_31 = arith.constant 0 : index
    %c0_32 = arith.constant 0 : index
    %66 = vector.load %arg3[%c0_31, %c0_32] : memref<20x1xf32, #tpu.memory_space<vmem>>, vector<20x1xf32>
    %cst_33 = arith.constant 9.99999974E-6 : f32
    %67 = vector.broadcast %cst_33 : f32 to vector<20x1xf32>
    %68 = arith.addf %65, %67 : vector<20x1xf32>
    %69 = math.rsqrt %68 : vector<20x1xf32>
    %70 = arith.mulf %66, %69 : vector<20x1xf32>
    %c0_34 = arith.constant 0 : index
    %c0_35 = arith.constant 0 : index
    %71 = vector.load %arg4[%c0_34, %c0_35] : memref<20x1xf32, #tpu.memory_space<vmem>>, vector<20x1xf32>
    %72 = arith.mulf %70, %61 : vector<20x1xf32>
    %73 = arith.subf %71, %72 : vector<20x1xf32>
    %c0_36 = arith.constant 0 : index
    %c0_37 = arith.constant 0 : index
    %74 = vector.load %arg5[%c0_36, %c0_37] : memref<64x16xf32, #tpu.memory_space<vmem>>, vector<64x16xf32>
    %cst_38 = arith.constant dense<0.000000e+00> : vector<16xf32>
    %75 = vector.multi_reduction <add>, %74, %cst_38 [0] : vector<64x16xf32> to vector<16xf32>
    %76 = vector.shape_cast %75 : vector<16xf32> to vector<1x16xf32>
    %77 = vector.broadcast %73 : vector<20x1xf32> to vector<20x16xf32>
    %78 = vector.broadcast %76 : vector<1x16xf32> to vector<20x16xf32>
    %79 = arith.mulf %77, %78 : vector<20x16xf32>
    %c0_39 = arith.constant 0 : index
    %c0_40 = arith.constant 0 : index
    %80 = vector.load %arg6[%c0_39, %c0_40] : memref<1x16xf32, #tpu.memory_space<vmem>>, vector<1x16xf32>
    %81 = vector.broadcast %80 : vector<1x16xf32> to vector<20x16xf32>
    %82 = arith.addf %79, %81 : vector<20x16xf32>
    %cst_41 = arith.constant dense<0.000000e+00> : vector<20x16xf32>
    %83 = tpu.matmul %10, %74, %cst_41 {dimension_numbers = #tpu.dot_dimension_numbers<[1], [0], [0], [1], [0, 0, 1, 1], [], []>} : vector<20x64xf32>, vector<64x16xf32>, vector<20x16xf32> -> vector<20x16xf32>
    %84 = vector.broadcast %70 : vector<20x1xf32> to vector<20x16xf32>
    %85 = arith.mulf %84, %83 : vector<20x16xf32>
    %86 = arith.addf %85, %82 : vector<20x16xf32>
    %c0_42 = arith.constant 0 : index
    %c0_43 = arith.constant 0 : index
    %c0_44 = arith.constant 0 : index
    %87 = vector.load %arg7[%c0_42, %c0_43, %c0_44] : memref<4x20x16xf32, #tpu.memory_space<vmem>>, vector<1x20x16xf32>
    %88 = vector.shape_cast %87 : vector<1x20x16xf32> to vector<20x16xf32>
    %89 = vector.shape_cast %86 : vector<20x16xf32> to vector<1x20x16xf32>
    tpu.vector_store %arg7[%c0_42, %c0_43, %c0_44], %89 {strides = array<i32>} : memref<4x20x16xf32, #tpu.memory_space<vmem>>, vector<1x20x16xf32>,
    %cst_45 = arith.constant dense<0.000000e+00> : vector<20x16xf32>
    %90 = tpu.matmul %24, %74, %cst_45 {dimension_numbers = #tpu.dot_dimension_numbers<[1], [0], [0], [1], [0, 0, 1, 1], [], []>} : vector<20x64xf32>, vector<64x16xf32>, vector<20x16xf32> -> vector<20x16xf32>
    %91 = vector.broadcast %70 : vector<20x1xf32> to vector<20x16xf32>
    %92 = arith.mulf %91, %90 : vector<20x16xf32>
    %93 = arith.addf %92, %82 : vector<20x16xf32>
    %c1_46 = arith.constant 1 : index
    %c0_47 = arith.constant 0 : index
    %c0_48 = arith.constant 0 : index
    %94 = vector.load %arg7[%c1_46, %c0_47, %c0_48] : memref<4x20x16xf32, #tpu.memory_space<vmem>>, vector<1x20x16xf32>
    %95 = vector.shape_cast %94 : vector<1x20x16xf32> to vector<20x16xf32>
    %96 = vector.shape_cast %93 : vector<20x16xf32> to vector<1x20x16xf32>
    tpu.vector_store %arg7[%c1_46, %c0_47, %c0_48], %96 {strides = array<i32>} : memref<4x20x16xf32, #tpu.memory_space<vmem>>, vector<1x20x16xf32>,
    %cst_49 = arith.constant dense<0.000000e+00> : vector<20x16xf32>
    %97 = tpu.matmul %38, %74, %cst_49 {dimension_numbers = #tpu.dot_dimension_numbers<[1], [0], [0], [1], [0, 0, 1, 1], [], []>} : vector<20x64xf32>, vector<64x16xf32>, vector<20x16xf32> -> vector<20x16xf32>
    %98 = vector.broadcast %70 : vector<20x1xf32> to vector<20x16xf32>
    %99 = arith.mulf %98, %97 : vector<20x16xf32>
    %100 = arith.addf %99, %82 : vector<20x16xf32>
    %c2_50 = arith.constant 2 : index
    %c0_51 = arith.constant 0 : index
    %c0_52 = arith.constant 0 : index
    %101 = vector.load %arg7[%c2_50, %c0_51, %c0_52] : memref<4x20x16xf32, #tpu.memory_space<vmem>>, vector<1x20x16xf32>
    %102 = vector.shape_cast %101 : vector<1x20x16xf32> to vector<20x16xf32>
    %103 = vector.shape_cast %100 : vector<20x16xf32> to vector<1x20x16xf32>
    tpu.vector_store %arg7[%c2_50, %c0_51, %c0_52], %103 {strides = array<i32>} : memref<4x20x16xf32, #tpu.memory_space<vmem>>, vector<1x20x16xf32>,
    %cst_53 = arith.constant dense<0.000000e+00> : vector<20x16xf32>
    %104 = tpu.matmul %52, %74, %cst_53 {dimension_numbers = #tpu.dot_dimension_numbers<[1], [0], [0], [1], [0, 0, 1, 1], [], []>} : vector<20x64xf32>, vector<64x16xf32>, vector<20x16xf32> -> vector<20x16xf32>
    %105 = vector.broadcast %70 : vector<20x1xf32> to vector<20x16xf32>
    %106 = arith.mulf %105, %104 : vector<20x16xf32>
    %107 = arith.addf %106, %82 : vector<20x16xf32>
    %c3_54 = arith.constant 3 : index
    %c0_55 = arith.constant 0 : index
    %c0_56 = arith.constant 0 : index
    %108 = vector.load %arg7[%c3_54, %c0_55, %c0_56] : memref<4x20x16xf32, #tpu.memory_space<vmem>>, vector<1x20x16xf32>
    %109 = vector.shape_cast %108 : vector<1x20x16xf32> to vector<20x16xf32>
    %110 = vector.shape_cast %107 : vector<20x16xf32> to vector<1x20x16xf32>
    tpu.vector_store %arg7[%c3_54, %c0_55, %c0_56], %110 {strides = array<i32>} : memref<4x20x16xf32, #tpu.memory_space<vmem>>, vector<1x20x16xf32>,
    return
  }
}

</mosaic_0001>

<llo_original>
// kernel: tpu_custom_call.1
$region0: #{tpu_custom_call.1}
  #allocation0 [shape = 'u32[]', space=smem, size = 0x4, offset = 0x4, fixed_abs, tag = 'smem constant byte address 0x4 - core index']
  #allocation1 [shape = 'u32[144,128]{1,0:T(1,128)}', space=vmem, size = 0x12000, scoped, tag = 'internal scratch']
  %s0 = inlined_call_operand.vmem [shape: f32[4,20,32], index: 0, kind: input, shape index: {}]
  %s1 = inlined_call_operand.vmem [shape: f32[32,64], index: 1, kind: input, shape index: {}]
  %s2 = inlined_call_operand.vmem [shape: f32[1,64], index: 2, kind: input, shape index: {}]
  %s3 = inlined_call_operand.vmem [shape: f32[20,1], index: 3, kind: input, shape index: {}]
  %s4 = inlined_call_operand.vmem [shape: f32[20,1], index: 4, kind: input, shape index: {}]
  %s5 = inlined_call_operand.vmem [shape: f32[64,16], index: 5, kind: input, shape index: {}]
  %s6 = inlined_call_operand.vmem [shape: f32[1,16], index: 6, kind: input, shape index: {}]
  %s7 = inlined_call_operand.vmem [shape: f32[4,20,16], index: 7, kind: output, shape index: {}]
  %s8 = sld [smem:[#allocation0]]
  $region38: #{tpu_custom_call.1} parent=0
    _
  %s10 = ssub.s32 1, %s8
  %s11 = scalar_select 0, %s10, %s8
  // Predicated region
  $region2: #{tpu_custom_call.1} parent=0 // pred_check
    _
  $region3: #{tpu_custom_call.1} parent=0 // pred_check_branch
    %13 = sbr.rel (0) target = $region5
  $region4: #{tpu_custom_call.1} parent=0 // pred_region
    _
  $region5: #{tpu_custom_call.1} parent=0 // pred_fallthru
    _
  // Predicated region
  $region6: #{tpu_custom_call.1} parent=0 // pred_check
    _
  $region7: #{tpu_custom_call.1} parent=0 // pred_check_branch
    %15 = sbr.rel (0) target = $region9
  $region8: #{tpu_custom_call.1} parent=0 // pred_region
    _
  $region9: #{tpu_custom_call.1} parent=0 // pred_fallthru
    _
  // Predicated region
  $region10: #{tpu_custom_call.1} parent=0 // pred_check
    _
  $region11: #{tpu_custom_call.1} parent=0 // pred_check_branch
    %17 = sbr.rel (0) target = $region13
  $region12: #{tpu_custom_call.1} parent=0 // pred_region
    _
  $region13: #{tpu_custom_call.1} parent=0 // pred_fallthru
    _
  // Predicated region
  $region14: #{tpu_custom_call.1} parent=0 // pred_check
    _
  $region15: #{tpu_custom_call.1} parent=0 // pred_check_branch
    %19 = sbr.rel (0) target = $region17
  $region16: #{tpu_custom_call.1} parent=0 // pred_region
    _
  $region17: #{tpu_custom_call.1} parent=0 // pred_fallthru
    _
  // Predicated region
  $region18: #{tpu_custom_call.1} parent=0 // pred_check
    _
  $region19: #{tpu_custom_call.1} parent=0 // pred_check_branch
    %21 = sbr.rel (0) target = $region21
  $region20: #{tpu_custom_call.1} parent=0 // pred_region
    _
  $region21: #{tpu_custom_call.1} parent=0 // pred_fallthru
    _
  // Predicated region
  $region22: #{tpu_custom_call.1} parent=0 // pred_check
    _
  $region23: #{tpu_custom_call.1} parent=0 // pred_check_branch
    %23 = sbr.rel (0) target = $region25
  $region24: #{tpu_custom_call.1} parent=0 // pred_region
    _
  $region25: #{tpu_custom_call.1} parent=0 // pred_fallthru
    _
  // Predicated region
  $region26: #{tpu_custom_call.1} parent=0 // pred_check
    _
  $region27: #{tpu_custom_call.1} parent=0 // pred_check_branch
    %25 = sbr.rel (0) target = $region29
  $region28: #{tpu_custom_call.1} parent=0 // pred_region
    _
  $region29: #{tpu_custom_call.1} parent=0 // pred_fallthru
    _
  %v26 = vld [vmem:[%s1] sm:$0xff]
  %v27 = vld [vmem:[%s1 + $0x8] sm:$0xff]
  %v28 = vld [vmem:[%s1 + $0x10] sm:$0xff]
  %v29 = vld [vmem:[%s1 + $0x18] sm:$0xff]
  %v30 = vld [vmem:[%s2] sm:$0x1]
  %v31 = vld [vmem:[%s0] sm:$0xff]
  %v32 = vld [vmem:[%s0 + $0x8] sm:$0xff]
  %v33 = vld [vmem:[%s0 + $0x10] sm:$0xf]
  %v35 = vlaneseq
  %v36 = vshrl.u32 %v35, 7
  %v37 = vsub.s32 0, %v36
  %v38 = vrot.slane %v30, %v37
  %vm40 = vcmask 261120
  %v42 = vsel %vm40, %v31, 0
  %v45 = vsel %vm40, %v32, 0
  %v48 = vsel %vm40, %v33, 0
  %50 = vmatprep.subr.mxu0 0.0
  %51 = vmatpush1.msra.mxu0 %v26
  %52 = vmatprep.subr.mxu0 0.0
  %53 = vmatpush1.msra.mxu0 %v27
  %54 = vmatprep.subr.mxu0 0.0
  %55 = vmatpush1.msra.mxu0 %v28
  %56 = vmatprep.subr.mxu0 0.0
  %57 = vmatpush1.msra.mxu0 %v29
  %58 = vmatprep.subr.mxu0 0.0
  %59 = vmatpush1.msra.mxu0 0.0
  %60 = vmatprep.subr.mxu0 0.0
  %61 = vmatpush1.msra.mxu0 0.0
  %62 = vmatprep.subr.mxu0 0.0
  %63 = vmatpush1.msra.mxu0 0.0
  %64 = vmatprep.subr.mxu0 0.0
  %65 = vmatpush1.msra.mxu0 0.0
  %66 = vmatprep.subr.mxu0 0.0
  %67 = vmatpush1.msra.mxu0 0.0
  %68 = vmatprep.subr.mxu0 0.0
  %69 = vmatpush1.msra.mxu0 0.0
  %70 = vmatprep.subr.mxu0 0.0
  %71 = vmatpush1.msra.mxu0 0.0
  %72 = vmatprep.subr.mxu0 0.0
  %73 = vmatpush1.msra.mxu0 0.0
  %74 = vmatprep.subr.mxu0 0.0
  %75 = vmatpush1.msra.mxu0 0.0
  %76 = vmatprep.subr.mxu0 0.0
  %77 = vmatpush1.msra.mxu0 0.0
  %78 = vmatprep.subr.mxu0 0.0
  %79 = vmatpush1.msra.mxu0 0.0
  %80 = vmatprep.subr.mxu0 0.0
  %81 = vmatpush1.msra.mxu0 0.0
  %82 = vmatprep.subr.mxu0 0.0
  %83 = vmatpush1.msra.mxu0 0.0
  %84 = vmatprep.subr.mxu0 0.0
  %85 = vmatpush1.msra.mxu0 0.0
  %86 = vmatprep.subr.mxu0 0.0
  %87 = vmatpush1.msra.mxu0 0.0
  %88 = vmatprep.subr.mxu0 0.0
  %89 = vmatpush1.msra.mxu0 0.0
  %90 = vmatprep.subr.mxu0 0.0
  %91 = vmatpush1.msra.mxu0 0.0
  %92 = vmatprep.subr.mxu0 0.0
  %93 = vmatpush1.msra.mxu0 0.0
  %94 = vmatprep.subr.mxu0 0.0
  %95 = vmatpush1.msra.mxu0 0.0
  %96 = vmatprep.subr.mxu0 0.0
  %97 = vmatpush1.msra.mxu0 0.0
  %98 = vmatprep.subr.mxu0 0.0
  %99 = vmatpush1.msra.mxu0 0.0
  %100 = vmatprep.subr.mxu0 0.0
  %101 = vmatpush1.msra.mxu0 0.0
  %102 = vmatprep.subr.mxu0 0.0
  %103 = vmatpush1.msra.mxu0 0.0
  %104 = vmatprep.subr.mxu0 0.0
  %105 = vmatpush1.msra.mxu0 0.0
  %106 = vmatprep.subr.mxu0 0.0
  %107 = vmatpush1.msra.mxu0 0.0
  %108 = vmatprep.subr.mxu0 0.0
  %109 = vmatpush1.msra.mxu0 0.0
  %110 = vmatprep.subr.mxu0 0.0
  %111 = vmatpush1.msra.mxu0 0.0
  %112 = vmatprep.subr.mxu0 0.0
  %113 = vmatpush1.msra.mxu0 0.0
  %114 = vmatprep.mubr.f32.mxu0 0.0
  %115 = vmatmul.mubr.f32.gmra.mrb[0].mxu0 %v42
  %v116 = vpop.f32.mrb[0].mxu0
  %v117 = vadd.f32 %v38, %v116
  %v118 = vpop.f32.mrb[0].mxu0
  %119 = vmatprep.mubr.f32.mxu0 0.0
  %120 = vmatmul.mubr.f32.gmra.mrb[0].mxu0 %v45
  %v121 = vpop.f32.mrb[0].mxu0
  %v122 = vadd.f32 %v38, %v121
  %v123 = vpop.f32.mrb[0].mxu0
  %124 = vmatprep.mubr.f32.mxu0 0.0
  %125 = vmatmul.mubr.f32.gmra.mrb[0].mxu0 %v48
  %v126 = vpop.f32.mrb[0].mxu0
  %v127 = vadd.f32 %v38, %v126
  %v128 = vpop.f32.mrb[0].mxu0
  %129 = vdwg.mxu0
  %v130 = vmax.f32 %v117, 0.0
  %v131 = vmax.f32 %v122, 0.0
  %v132 = vmax.f32 %v127, 0.0
  %vm133 = vcmask 523264
  %v134 = vsel %vm133, %v130, 0.0
  %135 = vadd.xlane.f32.xlu0 %v134
  %v136 = vpop.xlane.xlu0 %135
  %v137 = vsel %vm133, %v131, 0.0
  %138 = vadd.xlane.f32.xlu0 %v137
  %v139 = vpop.xlane.xlu0 %138
  %vm140 = vcmask 519168
  %v141 = vsel %vm140, %v132, 0.0
  %142 = vadd.xlane.f32.xlu0 %v141
  %v143 = vpop.xlane.xlu0 %142
  %v144 = vadd.f32 %v136, 0.0
  %v145 = vadd.f32 %v139, 0.0
  %v146 = vadd.f32 %v143, 0.0
  %v147 = vmul.f32 %v130, %v130
  %v148 = vmul.f32 %v131, %v131
  %v149 = vmul.f32 %v132, %v132
  %v150 = vsel %vm133, %v147, 0.0
  %151 = vadd.xlane.f32.xlu0 %v150
  %v152 = vpop.xlane.xlu0 %151
  %v153 = vsel %vm133, %v148, 0.0
  %154 = vadd.xlane.f32.xlu0 %v153
  %v155 = vpop.xlane.xlu0 %154
  %v156 = vsel %vm140, %v149, 0.0
  %157 = vadd.xlane.f32.xlu0 %v156
  %v158 = vpop.xlane.xlu0 %157
  %v159 = vadd.f32 %v152, 0.0
  %v160 = vadd.f32 %v155, 0.0
  %v161 = vadd.f32 %v158, 0.0
  %s162 = scalar_lea.vmem %s0, 24
  %v163 = vld [vmem:[%s162] sm:$0xff]
  %v164 = vld [vmem:[%s162 + $0x8] sm:$0xff]
  %v165 = vld [vmem:[%s162 + $0x10] sm:$0xf]
  %v167 = vsel %vm40, %v163, 0
  %v170 = vsel %vm40, %v164, 0
  %v173 = vsel %vm40, %v165, 0
  %175 = vmatprep.subr.mxu0 0.0
  %176 = vmatpush1.msra.mxu0 %v26
  %177 = vmatprep.subr.mxu0 0.0
  %178 = vmatpush1.msra.mxu0 %v27
  %179 = vmatprep.subr.mxu0 0.0
  %180 = vmatpush1.msra.mxu0 %v28
  %181 = vmatprep.subr.mxu0 0.0
  %182 = vmatpush1.msra.mxu0 %v29
  %183 = vmatprep.subr.mxu0 0.0
  %184 = vmatpush1.msra.mxu0 0.0
  %185 = vmatprep.subr.mxu0 0.0
  %186 = vmatpush1.msra.mxu0 0.0
  %187 = vmatprep.subr.mxu0 0.0
  %188 = vmatpush1.msra.mxu0 0.0
  %189 = vmatprep.subr.mxu0 0.0
  %190 = vmatpush1.msra.mxu0 0.0
  %191 = vmatprep.subr.mxu0 0.0
  %192 = vmatpush1.msra.mxu0 0.0
  %193 = vmatprep.subr.mxu0 0.0
  %194 = vmatpush1.msra.mxu0 0.0
  %195 = vmatprep.subr.mxu0 0.0
  %196 = vmatpush1.msra.mxu0 0.0
  %197 = vmatprep.subr.mxu0 0.0
  %198 = vmatpush1.msra.mxu0 0.0
  %199 = vmatprep.subr.mxu0 0.0
  %200 = vmatpush1.msra.mxu0 0.0
  %201 = vmatprep.subr.mxu0 0.0
  %202 = vmatpush1.msra.mxu0 0.0
  %203 = vmatprep.subr.mxu0 0.0
  %204 = vmatpush1.msra.mxu0 0.0
  %205 = vmatprep.subr.mxu0 0.0
  %206 = vmatpush1.msra.mxu0 0.0
  %207 = vmatprep.subr.mxu0 0.0
  %208 = vmatpush1.msra.mxu0 0.0
  %209 = vmatprep.subr.mxu0 0.0
  %210 = vmatpush1.msra.mxu0 0.0
  %211 = vmatprep.subr.mxu0 0.0
  %212 = vmatpush1.msra.mxu0 0.0
  %213 = vmatprep.subr.mxu0 0.0
  %214 = vmatpush1.msra.mxu0 0.0
  %215 = vmatprep.subr.mxu0 0.0
  %216 = vmatpush1.msra.mxu0 0.0
  %217 = vmatprep.subr.mxu0 0.0
  %218 = vmatpush1.msra.mxu0 0.0
  %219 = vmatprep.subr.mxu0 0.0
  %220 = vmatpush1.msra.mxu0 0.0
  %221 = vmatprep.subr.mxu0 0.0
  %222 = vmatpush1.msra.mxu0 0.0
  %223 = vmatprep.subr.mxu0 0.0
  %224 = vmatpush1.msra.mxu0 0.0
  %225 = vmatprep.subr.mxu0 0.0
  %226 = vmatpush1.msra.mxu0 0.0
  %227 = vmatprep.subr.mxu0 0.0
  %228 = vmatpush1.msra.mxu0 0.0
  %229 = vmatprep.subr.mxu0 0.0
  %230 = vmatpush1.msra.mxu0 0.0
  %231 = vmatprep.subr.mxu0 0.0
  %232 = vmatpush1.msra.mxu0 0.0
  %233 = vmatprep.subr.mxu0 0.0
  %234 = vmatpush1.msra.mxu0 0.0
  %235 = vmatprep.subr.mxu0 0.0
  %236 = vmatpush1.msra.mxu0 0.0
  %237 = vmatprep.subr.mxu0 0.0
  %238 = vmatpush1.msra.mxu0 0.0
  %239 = vmatprep.mubr.f32.mxu0 0.0
  %240 = vmatmul.mubr.f32.gmra.mrb[0].mxu0 %v167
  %v241 = vpop.f32.mrb[0].mxu0
  %v242 = vadd.f32 %v38, %v241
  %v243 = vpop.f32.mrb[0].mxu0
  %244 = vmatprep.mubr.f32.mxu0 0.0
  %245 = vmatmul.mubr.f32.gmra.mrb[0].mxu0 %v170
  %v246 = vpop.f32.mrb[0].mxu0
  %v247 = vadd.f32 %v38, %v246
  %v248 = vpop.f32.mrb[0].mxu0
  %249 = vmatprep.mubr.f32.mxu0 0.0
  %250 = vmatmul.mubr.f32.gmra.mrb[0].mxu0 %v173
  %v251 = vpop.f32.mrb[0].mxu0
  %v252 = vadd.f32 %v38, %v251
  %v253 = vpop.f32.mrb[0].mxu0
  %254 = vdwg.mxu0
  %v255 = vmax.f32 %v242, 0.0
  %v256 = vmax.f32 %v247, 0.0
  %v257 = vmax.f32 %v252, 0.0
  %v258 = vsel %vm133, %v255, 0.0
  %259 = vadd.xlane.f32.xlu0 %v258
  %v260 = vpop.xlane.xlu0 %259
  %v261 = vsel %vm133, %v256, 0.0
  %262 = vadd.xlane.f32.xlu0 %v261
  %v263 = vpop.xlane.xlu0 %262
  %v264 = vsel %vm140, %v257, 0.0
  %265 = vadd.xlane.f32.xlu0 %v264
  %v266 = vpop.xlane.xlu0 %265
  %v267 = vadd.f32 %v144, %v260
  %v268 = vadd.f32 %v145, %v263
  %v269 = vadd.f32 %v146, %v266
  %v270 = vmul.f32 %v255, %v255
  %v271 = vmul.f32 %v256, %v256
  %v272 = vmul.f32 %v257, %v257
  %v273 = vsel %vm133, %v270, 0.0
  %274 = vadd.xlane.f32.xlu0 %v273
  %v275 = vpop.xlane.xlu0 %274
  %v276 = vsel %vm133, %v271, 0.0
  %277 = vadd.xlane.f32.xlu0 %v276
  %v278 = vpop.xlane.xlu0 %277
  %v279 = vsel %vm140, %v272, 0.0
  %280 = vadd.xlane.f32.xlu0 %v279
  %v281 = vpop.xlane.xlu0 %280
  %v282 = vadd.f32 %v159, %v275
  %v283 = vadd.f32 %v160, %v278
  %v284 = vadd.f32 %v161, %v281
  %s285 = scalar_lea.vmem %s0, 48
  %v286 = vld [vmem:[%s285] sm:$0xff]
  %v287 = vld [vmem:[%s285 + $0x8] sm:$0xff]
  %v288 = vld [vmem:[%s285 + $0x10] sm:$0xf]
  %v290 = vsel %vm40, %v286, 0
  %v293 = vsel %vm40, %v287, 0
  %v296 = vsel %vm40, %v288, 0
  %298 = vmatprep.subr.mxu0 0.0
  %299 = vmatpush1.msra.mxu0 %v26
  %300 = vmatprep.subr.mxu0 0.0
  %301 = vmatpush1.msra.mxu0 %v27
  %302 = vmatprep.subr.mxu0 0.0
  %303 = vmatpush1.msra.mxu0 %v28
  %304 = vmatprep.subr.mxu0 0.0
  %305 = vmatpush1.msra.mxu0 %v29
  %306 = vmatprep.subr.mxu0 0.0
  %307 = vmatpush1.msra.mxu0 0.0
  %308 = vmatprep.subr.mxu0 0.0
  %309 = vmatpush1.msra.mxu0 0.0
  %310 = vmatprep.subr.mxu0 0.0
  %311 = vmatpush1.msra.mxu0 0.0
  %312 = vmatprep.subr.mxu0 0.0
  %313 = vmatpush1.msra.mxu0 0.0
  %314 = vmatprep.subr.mxu0 0.0
  %315 = vmatpush1.msra.mxu0 0.0
  %316 = vmatprep.subr.mxu0 0.0
  %317 = vmatpush1.msra.mxu0 0.0
  %318 = vmatprep.subr.mxu0 0.0
  %319 = vmatpush1.msra.mxu0 0.0
  %320 = vmatprep.subr.mxu0 0.0
  %321 = vmatpush1.msra.mxu0 0.0
  %322 = vmatprep.subr.mxu0 0.0
  %323 = vmatpush1.msra.mxu0 0.0
  %324 = vmatprep.subr.mxu0 0.0
  %325 = vmatpush1.msra.mxu0 0.0
  %326 = vmatprep.subr.mxu0 0.0
  %327 = vmatpush1.msra.mxu0 0.0
  %328 = vmatprep.subr.mxu0 0.0
  %329 = vmatpush1.msra.mxu0 0.0
  %330 = vmatprep.subr.mxu0 0.0
  %331 = vmatpush1.msra.mxu0 0.0
  %332 = vmatprep.subr.mxu0 0.0
  %333 = vmatpush1.msra.mxu0 0.0
  %334 = vmatprep.subr.mxu0 0.0
  %335 = vmatpush1.msra.mxu0 0.0
  %336 = vmatprep.subr.mxu0 0.0
  %337 = vmatpush1.msra.mxu0 0.0
  %338 = vmatprep.subr.mxu0 0.0
  %339 = vmatpush1.msra.mxu0 0.0
  %340 = vmatprep.subr.mxu0 0.0
  %341 = vmatpush1.msra.mxu0 0.0
  %342 = vmatprep.subr.mxu0 0.0
  %343 = vmatpush1.msra.mxu0 0.0
  %344 = vmatprep.subr.mxu0 0.0
  %345 = vmatpush1.msra.mxu0 0.0
  %346 = vmatprep.subr.mxu0 0.0
  %347 = vmatpush1.msra.mxu0 0.0
  %348 = vmatprep.subr.mxu0 0.0
  %349 = vmatpush1.msra.mxu0 0.0
  %350 = vmatprep.subr.mxu0 0.0
  %351 = vmatpush1.msra.mxu0 0.0
  %352 = vmatprep.subr.mxu0 0.0
  %353 = vmatpush1.msra.mxu0 0.0
  %354 = vmatprep.subr.mxu0 0.0
  %355 = vmatpush1.msra.mxu0 0.0
  %356 = vmatprep.subr.mxu0 0.0
  %357 = vmatpush1.msra.mxu0 0.0
  %358 = vmatprep.subr.mxu0 0.0
  %359 = vmatpush1.msra.mxu0 0.0
  %360 = vmatprep.subr.mxu0 0.0
  %361 = vmatpush1.msra.mxu0 0.0
  %362 = vmatprep.mubr.f32.mxu0 0.0
  %363 = vmatmul.mubr.f32.gmra.mrb[0].mxu0 %v290
  %v364 = vpop.f32.mrb[0].mxu0
  %v365 = vadd.f32 %v38, %v364
  %v366 = vpop.f32.mrb[0].mxu0
  %367 = vmatprep.mubr.f32.mxu0 0.0
  %368 = vmatmul.mubr.f32.gmra.mrb[0].mxu0 %v293
  %v369 = vpop.f32.mrb[0].mxu0
  %v370 = vadd.f32 %v38, %v369
  %v371 = vpop.f32.mrb[0].mxu0
  %372 = vmatprep.mubr.f32.mxu0 0.0
  %373 = vmatmul.mubr.f32.gmra.mrb[0].mxu0 %v296
  %v374 = vpop.f32.mrb[0].mxu0
  %v375 = vadd.f32 %v38, %v374
  %v376 = vpop.f32.mrb[0].mxu0
  %377 = vdwg.mxu0
  %v378 = vmax.f32 %v365, 0.0
  %v379 = vmax.f32 %v370, 0.0
  %v380 = vmax.f32 %v375, 0.0
  %v381 = vsel %vm133, %v378, 0.0
  %382 = vadd.xlane.f32.xlu0 %v381
  %v383 = vpop.xlane.xlu0 %382
  %v384 = vsel %vm133, %v379, 0.0
  %385 = vadd.xlane.f32.xlu0 %v384
  %v386 = vpop.xlane.xlu0 %385
  %v387 = vsel %vm140, %v380, 0.0
  %388 = vadd.xlane.f32.xlu0 %v387
  %v389 = vpop.xlane.xlu0 %388
  %v390 = vadd.f32 %v267, %v383
  %v391 = vadd.f32 %v268, %v386
  %v392 = vadd.f32 %v269, %v389
  %v393 = vmul.f32 %v378, %v378
  %v394 = vmul.f32 %v379, %v379
  %v395 = vmul.f32 %v380, %v380
  %v396 = vsel %vm133, %v393, 0.0
  %397 = vadd.xlane.f32.xlu0 %v396
  %v398 = vpop.xlane.xlu0 %397
  %v399 = vsel %vm133, %v394, 0.0
  %400 = vadd.xlane.f32.xlu0 %v399
  %v401 = vpop.xlane.xlu0 %400
  %v402 = vsel %vm140, %v395, 0.0
  %403 = vadd.xlane.f32.xlu0 %v402
  %v404 = vpop.xlane.xlu0 %403
  %v405 = vadd.f32 %v282, %v398
  %v406 = vadd.f32 %v283, %v401
  %v407 = vadd.f32 %v284, %v404
  %s408 = scalar_lea.vmem %s0, 72
  %v409 = vld [vmem:[%s408] sm:$0xff]
  %v410 = vld [vmem:[%s408 + $0x8] sm:$0xff]
  %v411 = vld [vmem:[%s408 + $0x10] sm:$0xf]
  %v413 = vsel %vm40, %v409, 0
  %v416 = vsel %vm40, %v410, 0
  %v419 = vsel %vm40, %v411, 0
  %421 = vmatprep.subr.mxu0 0.0
  %422 = vmatpush1.msra.mxu0 %v26
  %423 = vmatprep.subr.mxu0 0.0
  %424 = vmatpush1.msra.mxu0 %v27
  %425 = vmatprep.subr.mxu0 0.0
  %426 = vmatpush1.msra.mxu0 %v28
  %427 = vmatprep.subr.mxu0 0.0
  %428 = vmatpush1.msra.mxu0 %v29
  %429 = vmatprep.subr.mxu0 0.0
  %430 = vmatpush1.msra.mxu0 0.0
  %431 = vmatprep.subr.mxu0 0.0
  %432 = vmatpush1.msra.mxu0 0.0
  %433 = vmatprep.subr.mxu0 0.0
  %434 = vmatpush1.msra.mxu0 0.0
  %435 = vmatprep.subr.mxu0 0.0
  %436 = vmatpush1.msra.mxu0 0.0
  %437 = vmatprep.subr.mxu0 0.0
  %438 = vmatpush1.msra.mxu0 0.0
  %439 = vmatprep.subr.mxu0 0.0
  %440 = vmatpush1.msra.mxu0 0.0
  %441 = vmatprep.subr.mxu0 0.0
  %442 = vmatpush1.msra.mxu0 0.0
  %443 = vmatprep.subr.mxu0 0.0
  %444 = vmatpush1.msra.mxu0 0.0
  %445 = vmatprep.subr.mxu0 0.0
  %446 = vmatpush1.msra.mxu0 0.0
  %447 = vmatprep.subr.mxu0 0.0
  %448 = vmatpush1.msra.mxu0 0.0
  %449 = vmatprep.subr.mxu0 0.0
  %450 = vmatpush1.msra.mxu0 0.0
  %451 = vmatprep.subr.mxu0 0.0
  %452 = vmatpush1.msra.mxu0 0.0
  %453 = vmatprep.subr.mxu0 0.0
  %454 = vmatpush1.msra.mxu0 0.0
  %455 = vmatprep.subr.mxu0 0.0
  %456 = vmatpush1.msra.mxu0 0.0
  %457 = vmatprep.subr.mxu0 0.0
  %458 = vmatpush1.msra.mxu0 0.0
  %459 = vmatprep.subr.mxu0 0.0
  %460 = vmatpush1.msra.mxu0 0.0
  %461 = vmatprep.subr.mxu0 0.0
  %462 = vmatpush1.msra.mxu0 0.0
  %463 = vmatprep.subr.mxu0 0.0
  %464 = vmatpush1.msra.mxu0 0.0
  %465 = vmatprep.subr.mxu0 0.0
  %466 = vmatpush1.msra.mxu0 0.0
  %467 = vmatprep.subr.mxu0 0.0
  %468 = vmatpush1.msra.mxu0 0.0
  %469 = vmatprep.subr.mxu0 0.0
  %470 = vmatpush1.msra.mxu0 0.0
  %471 = vmatprep.subr.mxu0 0.0
  %472 = vmatpush1.msra.mxu0 0.0
  %473 = vmatprep.subr.mxu0 0.0
  %474 = vmatpush1.msra.mxu0 0.0
  %475 = vmatprep.subr.mxu0 0.0
  %476 = vmatpush1.msra.mxu0 0.0
  %477 = vmatprep.subr.mxu0 0.0
  %478 = vmatpush1.msra.mxu0 0.0
  %479 = vmatprep.subr.mxu0 0.0
  %480 = vmatpush1.msra.mxu0 0.0
  %481 = vmatprep.subr.mxu0 0.0
  %482 = vmatpush1.msra.mxu0 0.0
  %483 = vmatprep.subr.mxu0 0.0
  %484 = vmatpush1.msra.mxu0 0.0
  %485 = vmatprep.mubr.f32.mxu0 0.0
  %486 = vmatmul.mubr.f32.gmra.mrb[0].mxu0 %v413
  %v487 = vpop.f32.mrb[0].mxu0
  %v488 = vadd.f32 %v38, %v487
  %v489 = vpop.f32.mrb[0].mxu0
  %490 = vmatprep.mubr.f32.mxu0 0.0
  %491 = vmatmul.mubr.f32.gmra.mrb[0].mxu0 %v416
  %v492 = vpop.f32.mrb[0].mxu0
  %v493 = vadd.f32 %v38, %v492
  %v494 = vpop.f32.mrb[0].mxu0
  %495 = vmatprep.mubr.f32.mxu0 0.0
  %496 = vmatmul.mubr.f32.gmra.mrb[0].mxu0 %v419
  %v497 = vpop.f32.mrb[0].mxu0
  %v498 = vadd.f32 %v38, %v497
  %v499 = vpop.f32.mrb[0].mxu0
  %500 = vdwg.mxu0
  %v501 = vmax.f32 %v488, 0.0
  %v502 = vmax.f32 %v493, 0.0
  %v503 = vmax.f32 %v498, 0.0
  %v504 = vsel %vm133, %v501, 0.0
  %505 = vadd.xlane.f32.xlu0 %v504
  %v506 = vpop.xlane.xlu0 %505
  %v507 = vsel %vm133, %v502, 0.0
  %508 = vadd.xlane.f32.xlu0 %v507
  %v509 = vpop.xlane.xlu0 %508
  %v510 = vsel %vm140, %v503, 0.0
  %511 = vadd.xlane.f32.xlu0 %v510
  %v512 = vpop.xlane.xlu0 %511
  %v513 = vadd.f32 %v390, %v506
  %v514 = vadd.f32 %v391, %v509
  %v515 = vadd.f32 %v392, %v512
  %v516 = vmul.f32 %v501, %v501
  %v517 = vmul.f32 %v502, %v502
  %v518 = vmul.f32 %v503, %v503
  %v519 = vsel %vm133, %v516, 0.0
  %520 = vadd.xlane.f32.xlu0 %v519
  %v521 = vpop.xlane.xlu0 %520
  %v522 = vsel %vm133, %v517, 0.0
  %523 = vadd.xlane.f32.xlu0 %v522
  %v524 = vpop.xlane.xlu0 %523
  %v525 = vsel %vm140, %v518, 0.0
  %526 = vadd.xlane.f32.xlu0 %v525
  %v527 = vpop.xlane.xlu0 %526
  %v528 = vadd.f32 %v405, %v521
  %v529 = vadd.f32 %v406, %v524
  %v530 = vadd.f32 %v407, %v527
  %v531 = vmul.f32 %v513, 0.00390625
  %v532 = vmul.f32 %v514, 0.00390625
  %v533 = vmul.f32 %v515, 0.00390625
  %v534 = vmul.f32 %v528, 0.00390625
  %v535 = vmul.f32 %v529, 0.00390625
  %v536 = vmul.f32 %v530, 0.00390625
  %v537 = vmul.f32 %v531, %v531
  %v538 = vmul.f32 %v532, %v532
  %v539 = vmul.f32 %v533, %v533
  %v540 = vsub.f32 %v534, %v537
  %v541 = vsub.f32 %v535, %v538
  %v542 = vsub.f32 %v536, %v539
  %v543 = vld [vmem:[%s3] sm:$0xff]
  %v544 = vld [vmem:[%s3 + $0x8] sm:$0xff]
  %v545 = vld [vmem:[%s3 + $0x10] sm:$0xf]
  %v546 = vadd.f32 %v540, 1e-05
  %v547 = vadd.f32 %v541, 1e-05
  %v548 = vadd.f32 %v542, 1e-05
  %v549 = vrsqrt.pop %v546
  %v550 = vrsqrt.pop %v547
  %v551 = vrsqrt.pop %v548
  %v552 = vmul.f32 %v543, %v549
  %v553 = vmul.f32 %v544, %v550
  %v554 = vmul.f32 %v545, %v551
  %v555 = vld [vmem:[%s4] sm:$0xff]
  %v556 = vld [vmem:[%s4 + $0x8] sm:$0xff]
  %v557 = vld [vmem:[%s4 + $0x10] sm:$0xf]
  %v558 = vmul.f32 %v552, %v531
  %v559 = vmul.f32 %v553, %v532
  %v560 = vmul.f32 %v554, %v533
  %v561 = vsub.f32 %v555, %v558
  %v562 = vsub.f32 %v556, %v559
  %v563 = vsub.f32 %v557, %v560
  %v564 = vld [vmem:[%s5] sm:$0xff]
  %v565 = vld [vmem:[%s5 + $0x8] sm:$0xff]
  %v566 = vld [vmem:[%s5 + $0x10] sm:$0xff]
  %v567 = vld [vmem:[%s5 + $0x18] sm:$0xff]
  %v568 = vld [vmem:[%s5 + $0x20] sm:$0xff]
  %v569 = vld [vmem:[%s5 + $0x28] sm:$0xff]
  %v570 = vld [vmem:[%s5 + $0x30] sm:$0xff]
  %v571 = vld [vmem:[%s5 + $0x38] sm:$0xff]
  %vm572 = vcmask 130048
  %v573 = vsel %vm572, %v564, 0.0
  %v574 = vsel %vm572, %v565, 0.0
  %v575 = vadd.f32 %v573, %v574
  %v576 = vsel %vm572, %v566, 0.0
  %v577 = vadd.f32 %v575, %v576
  %v578 = vsel %vm572, %v567, 0.0
  %v579 = vadd.f32 %v577, %v578
  %v580 = vsel %vm572, %v568, 0.0
  %v581 = vadd.f32 %v579, %v580
  %v582 = vsel %vm572, %v569, 0.0
  %v583 = vadd.f32 %v581, %v582
  %v584 = vsel %vm572, %v570, 0.0
  %v585 = vadd.f32 %v583, %v584
  %v586 = vsel %vm572, %v571, 0.0
  %v587 = vadd.f32 %v585, %v586
  %v588 = vrot.slane %v587, 4
  %v589 = vadd.f32 %v587, %v588
  %v590 = vrot.slane %v589, 2
  %v591 = vadd.f32 %v589, %v590
  %v592 = vrot.slane %v591, 1
  %v593 = vadd.f32 %v591, %v592
  %595 = vset.pattern.permute.xlu0 0
  %596 = vperm.xlu0 %595, %v561
  %v597 = vpop.permute.xlu0 %596
  %600 = vset.pattern.permute.xlu0 0
  %601 = vperm.xlu0 %600, %v562
  %v602 = vpop.permute.xlu0 %601
  %605 = vset.pattern.permute.xlu0 0
  %606 = vperm.xlu0 %605, %v563
  %v607 = vpop.permute.xlu0 %606
  %v609 = vmul.f32 %v597, %v593
  %v610 = vmul.f32 %v602, %v593
  %v611 = vmul.f32 %v607, %v593
  %v612 = vld [vmem:[%s6] sm:$0x1]
  %v614 = vlaneseq
  %v615 = vshrl.u32 %v614, 7
  %v616 = vsub.s32 0, %v615
  %v617 = vrot.slane %v612, %v616
  %v619 = vadd.f32 %v609, %v617
  %v620 = vadd.f32 %v610, %v617
  %v621 = vadd.f32 %v611, %v617
  %v623 = vsel %vm133, %v130, 0
  %v626 = vsel %vm133, %v131, 0
  %v629 = vsel %vm133, %v132, 0
  %631 = vmatprep.subr.mxu0 0.0
  %632 = vmatpush1.msra.mxu0 %v564
  %633 = vmatprep.subr.mxu0 0.0
  %634 = vmatpush1.msra.mxu0 %v565
  %635 = vmatprep.subr.mxu0 0.0
  %636 = vmatpush1.msra.mxu0 %v566
  %637 = vmatprep.subr.mxu0 0.0
  %638 = vmatpush1.msra.mxu0 %v567
  %639 = vmatprep.subr.mxu0 0.0
  %640 = vmatpush1.msra.mxu0 %v568
  %641 = vmatprep.subr.mxu0 0.0
  %642 = vmatpush1.msra.mxu0 %v569
  %643 = vmatprep.subr.mxu0 0.0
  %644 = vmatpush1.msra.mxu0 %v570
  %645 = vmatprep.subr.mxu0 0.0
  %646 = vmatpush1.msra.mxu0 %v571
  %647 = vmatprep.subr.mxu0 0.0
  %648 = vmatpush1.msra.mxu0 0.0
  %649 = vmatprep.subr.mxu0 0.0
  %650 = vmatpush1.msra.mxu0 0.0
  %651 = vmatprep.subr.mxu0 0.0
  %652 = vmatpush1.msra.mxu0 0.0
  %653 = vmatprep.subr.mxu0 0.0
  %654 = vmatpush1.msra.mxu0 0.0
  %655 = vmatprep.subr.mxu0 0.0
  %656 = vmatpush1.msra.mxu0 0.0
  %657 = vmatprep.subr.mxu0 0.0
  %658 = vmatpush1.msra.mxu0 0.0
  %659 = vmatprep.subr.mxu0 0.0
  %660 = vmatpush1.msra.mxu0 0.0
  %661 = vmatprep.subr.mxu0 0.0
  %662 = vmatpush1.msra.mxu0 0.0
  %663 = vmatprep.subr.mxu0 0.0
  %664 = vmatpush1.msra.mxu0 0.0
  %665 = vmatprep.subr.mxu0 0.0
  %666 = vmatpush1.msra.mxu0 0.0
  %667 = vmatprep.subr.mxu0 0.0
  %668 = vmatpush1.msra.mxu0 0.0
  %669 = vmatprep.subr.mxu0 0.0
  %670 = vmatpush1.msra.mxu0 0.0
  %671 = vmatprep.subr.mxu0 0.0
  %672 = vmatpush1.msra.mxu0 0.0
  %673 = vmatprep.subr.mxu0 0.0
  %674 = vmatpush1.msra.mxu0 0.0
  %675 = vmatprep.subr.mxu0 0.0
  %676 = vmatpush1.msra.mxu0 0.0
  %677 = vmatprep.subr.mxu0 0.0
  %678 = vmatpush1.msra.mxu0 0.0
  %679 = vmatprep.subr.mxu0 0.0
  %680 = vmatpush1.msra.mxu0 0.0
  %681 = vmatprep.subr.mxu0 0.0
  %682 = vmatpush1.msra.mxu0 0.0
  %683 = vmatprep.subr.mxu0 0.0
  %684 = vmatpush1.msra.mxu0 0.0
  %685 = vmatprep.subr.mxu0 0.0
  %686 = vmatpush1.msra.mxu0 0.0
  %687 = vmatprep.subr.mxu0 0.0
  %688 = vmatpush1.msra.mxu0 0.0
  %689 = vmatprep.subr.mxu0 0.0
  %690 = vmatpush1.msra.mxu0 0.0
  %691 = vmatprep.subr.mxu0 0.0
  %692 = vmatpush1.msra.mxu0 0.0
  %693 = vmatprep.subr.mxu0 0.0
  %694 = vmatpush1.msra.mxu0 0.0
  %695 = vmatprep.mubr.f32.mxu0 0.0
  %696 = vmatmul.mubr.f32.gmra.mrb[0].mxu0 %v623
  %v697 = vpop.f32.mrb[0].mxu0
  %v698 = vadd.f32 0.0, %v697
  %v699 = vpop.f32.mrb[0].mxu0
  %700 = vmatprep.mubr.f32.mxu0 0.0
  %701 = vmatmul.mubr.f32.gmra.mrb[0].mxu0 %v626
  %v702 = vpop.f32.mrb[0].mxu0
  %v703 = vadd.f32 0.0, %v702
  %v704 = vpop.f32.mrb[0].mxu0
  %705 = vmatprep.mubr.f32.mxu0 0.0
  %706 = vmatmul.mubr.f32.gmra.mrb[0].mxu0 %v629
  %v707 = vpop.f32.mrb[0].mxu0
  %v708 = vadd.f32 0.0, %v707
  %v709 = vpop.f32.mrb[0].mxu0
  %710 = vdwg.mxu0
  %712 = vset.pattern.permute.xlu0 0
  %713 = vperm.xlu0 %712, %v552
  %v714 = vpop.permute.xlu0 %713
  %717 = vset.pattern.permute.xlu0 0
  %718 = vperm.xlu0 %717, %v553
  %v719 = vpop.permute.xlu0 %718
  %722 = vset.pattern.permute.xlu0 0
  %723 = vperm.xlu0 %722, %v554
  %v724 = vpop.permute.xlu0 %723
  %v726 = vmul.f32 %v714, %v698
  %v727 = vmul.f32 %v719, %v703
  %v728 = vmul.f32 %v724, %v708
  %v729 = vadd.f32 %v726, %v619
  %v730 = vadd.f32 %v727, %v620
  %v731 = vadd.f32 %v728, %v621
  %732 = vst.msk [vmem:[%s7] sm:$0xff] %vm572, %v729
  %733 = vst.msk [vmem:[%s7 + $0x8] sm:$0xff] %vm572, %v730
  %vm734 = vcmask 125952
  %735 = vst.msk [vmem:[%s7 + $0x10] sm:$0xf] %vm734, %v731
  %v737 = vsel %vm133, %v255, 0
  %v740 = vsel %vm133, %v256, 0
  %v743 = vsel %vm133, %v257, 0
  %745 = vmatprep.subr.mxu0 0.0
  %746 = vmatpush1.msra.mxu0 %v564
  %747 = vmatprep.subr.mxu0 0.0
  %748 = vmatpush1.msra.mxu0 %v565
  %749 = vmatprep.subr.mxu0 0.0
  %750 = vmatpush1.msra.mxu0 %v566
  %751 = vmatprep.subr.mxu0 0.0
  %752 = vmatpush1.msra.mxu0 %v567
  %753 = vmatprep.subr.mxu0 0.0
  %754 = vmatpush1.msra.mxu0 %v568
  %755 = vmatprep.subr.mxu0 0.0
  %756 = vmatpush1.msra.mxu0 %v569
  %757 = vmatprep.subr.mxu0 0.0
  %758 = vmatpush1.msra.mxu0 %v570
  %759 = vmatprep.subr.mxu0 0.0
  %760 = vmatpush1.msra.mxu0 %v571
  %761 = vmatprep.subr.mxu0 0.0
  %762 = vmatpush1.msra.mxu0 0.0
  %763 = vmatprep.subr.mxu0 0.0
  %764 = vmatpush1.msra.mxu0 0.0
  %765 = vmatprep.subr.mxu0 0.0
  %766 = vmatpush1.msra.mxu0 0.0
  %767 = vmatprep.subr.mxu0 0.0
  %768 = vmatpush1.msra.mxu0 0.0
  %769 = vmatprep.subr.mxu0 0.0
  %770 = vmatpush1.msra.mxu0 0.0
  %771 = vmatprep.subr.mxu0 0.0
  %772 = vmatpush1.msra.mxu0 0.0
  %773 = vmatprep.subr.mxu0 0.0
  %774 = vmatpush1.msra.mxu0 0.0
  %775 = vmatprep.subr.mxu0 0.0
  %776 = vmatpush1.msra.mxu0 0.0
  %777 = vmatprep.subr.mxu0 0.0
  %778 = vmatpush1.msra.mxu0 0.0
  %779 = vmatprep.subr.mxu0 0.0
  %780 = vmatpush1.msra.mxu0 0.0
  %781 = vmatprep.subr.mxu0 0.0
  %782 = vmatpush1.msra.mxu0 0.0
  %783 = vmatprep.subr.mxu0 0.0
  %784 = vmatpush1.msra.mxu0 0.0
  %785 = vmatprep.subr.mxu0 0.0
  %786 = vmatpush1.msra.mxu0 0.0
  %787 = vmatprep.subr.mxu0 0.0
  %788 = vmatpush1.msra.mxu0 0.0
  %789 = vmatprep.subr.mxu0 0.0
  %790 = vmatpush1.msra.mxu0 0.0
  %791 = vmatprep.subr.mxu0 0.0
  %792 = vmatpush1.msra.mxu0 0.0
  %793 = vmatprep.subr.mxu0 0.0
  %794 = vmatpush1.msra.mxu0 0.0
  %795 = vmatprep.subr.mxu0 0.0
  %796 = vmatpush1.msra.mxu0 0.0
  %797 = vmatprep.subr.mxu0 0.0
  %798 = vmatpush1.msra.mxu0 0.0
  %799 = vmatprep.subr.mxu0 0.0
  %800 = vmatpush1.msra.mxu0 0.0
  %801 = vmatprep.subr.mxu0 0.0
  %802 = vmatpush1.msra.mxu0 0.0
  %803 = vmatprep.subr.mxu0 0.0
  %804 = vmatpush1.msra.mxu0 0.0
  %805 = vmatprep.subr.mxu0 0.0
  %806 = vmatpush1.msra.mxu0 0.0
  %807 = vmatprep.subr.mxu0 0.0
  %808 = vmatpush1.msra.mxu0 0.0
  %809 = vmatprep.mubr.f32.mxu0 0.0
  %810 = vmatmul.mubr.f32.gmra.mrb[0].mxu0 %v737
  %v811 = vpop.f32.mrb[0].mxu0
  %v812 = vadd.f32 0.0, %v811
  %v813 = vpop.f32.mrb[0].mxu0
  %814 = vmatprep.mubr.f32.mxu0 0.0
  %815 = vmatmul.mubr.f32.gmra.mrb[0].mxu0 %v740
  %v816 = vpop.f32.mrb[0].mxu0
  %v817 = vadd.f32 0.0, %v816
  %v818 = vpop.f32.mrb[0].mxu0
  %819 = vmatprep.mubr.f32.mxu0 0.0
  %820 = vmatmul.mubr.f32.gmra.mrb[0].mxu0 %v743
  %v821 = vpop.f32.mrb[0].mxu0
  %v822 = vadd.f32 0.0, %v821
  %v823 = vpop.f32.mrb[0].mxu0
  %824 = vdwg.mxu0
  %v825 = vmul.f32 %v714, %v812
  %v826 = vmul.f32 %v719, %v817
  %v827 = vmul.f32 %v724, %v822
  %v828 = vadd.f32 %v825, %v619
  %v829 = vadd.f32 %v826, %v620
  %v830 = vadd.f32 %v827, %v621
  %s831 = scalar_lea.vmem %s7, 24
  %832 = vst.msk [vmem:[%s831] sm:$0xff] %vm572, %v828
  %833 = vst.msk [vmem:[%s831 + $0x8] sm:$0xff] %vm572, %v829
  %834 = vst.msk [vmem:[%s831 + $0x10] sm:$0xf] %vm734, %v830
  %v836 = vsel %vm133, %v378, 0
  %v839 = vsel %vm133, %v379, 0
  %v842 = vsel %vm133, %v380, 0
  %844 = vmatprep.subr.mxu0 0.0
  %845 = vmatpush1.msra.mxu0 %v564
  %846 = vmatprep.subr.mxu0 0.0
  %847 = vmatpush1.msra.mxu0 %v565
  %848 = vmatprep.subr.mxu0 0.0
  %849 = vmatpush1.msra.mxu0 %v566
  %850 = vmatprep.subr.mxu0 0.0
  %851 = vmatpush1.msra.mxu0 %v567
  %852 = vmatprep.subr.mxu0 0.0
  %853 = vmatpush1.msra.mxu0 %v568
  %854 = vmatprep.subr.mxu0 0.0
  %855 = vmatpush1.msra.mxu0 %v569
  %856 = vmatprep.subr.mxu0 0.0
  %857 = vmatpush1.msra.mxu0 %v570
  %858 = vmatprep.subr.mxu0 0.0
  %859 = vmatpush1.msra.mxu0 %v571
  %860 = vmatprep.subr.mxu0 0.0
  %861 = vmatpush1.msra.mxu0 0.0
  %862 = vmatprep.subr.mxu0 0.0
  %863 = vmatpush1.msra.mxu0 0.0
  %864 = vmatprep.subr.mxu0 0.0
  %865 = vmatpush1.msra.mxu0 0.0
  %866 = vmatprep.subr.mxu0 0.0
  %867 = vmatpush1.msra.mxu0 0.0
  %868 = vmatprep.subr.mxu0 0.0
  %869 = vmatpush1.msra.mxu0 0.0
  %870 = vmatprep.subr.mxu0 0.0
  %871 = vmatpush1.msra.mxu0 0.0
  %872 = vmatprep.subr.mxu0 0.0
  %873 = vmatpush1.msra.mxu0 0.0
  %874 = vmatprep.subr.mxu0 0.0
  %875 = vmatpush1.msra.mxu0 0.0
  %876 = vmatprep.subr.mxu0 0.0
  %877 = vmatpush1.msra.mxu0 0.0
  %878 = vmatprep.subr.mxu0 0.0
  %879 = vmatpush1.msra.mxu0 0.0
  %880 = vmatprep.subr.mxu0 0.0
  %881 = vmatpush1.msra.mxu0 0.0
  %882 = vmatprep.subr.mxu0 0.0
  %883 = vmatpush1.msra.mxu0 0.0
  %884 = vmatprep.subr.mxu0 0.0
  %885 = vmatpush1.msra.mxu0 0.0
  %886 = vmatprep.subr.mxu0 0.0
  %887 = vmatpush1.msra.mxu0 0.0
  %888 = vmatprep.subr.mxu0 0.0
  %889 = vmatpush1.msra.mxu0 0.0
  %890 = vmatprep.subr.mxu0 0.0
  %891 = vmatpush1.msra.mxu0 0.0
  %892 = vmatprep.subr.mxu0 0.0
  %893 = vmatpush1.msra.mxu0 0.0
  %894 = vmatprep.subr.mxu0 0.0
  %895 = vmatpush1.msra.mxu0 0.0
  %896 = vmatprep.subr.mxu0 0.0
  %897 = vmatpush1.msra.mxu0 0.0
  %898 = vmatprep.subr.mxu0 0.0
  %899 = vmatpush1.msra.mxu0 0.0
  %900 = vmatprep.subr.mxu0 0.0
  %901 = vmatpush1.msra.mxu0 0.0
  %902 = vmatprep.subr.mxu0 0.0
  %903 = vmatpush1.msra.mxu0 0.0
  %904 = vmatprep.subr.mxu0 0.0
  %905 = vmatpush1.msra.mxu0 0.0
  %906 = vmatprep.subr.mxu0 0.0
  %907 = vmatpush1.msra.mxu0 0.0
  %908 = vmatprep.mubr.f32.mxu0 0.0
  %909 = vmatmul.mubr.f32.gmra.mrb[0].mxu0 %v836
  %v910 = vpop.f32.mrb[0].mxu0
  %v911 = vadd.f32 0.0, %v910
  %v912 = vpop.f32.mrb[0].mxu0
  %913 = vmatprep.mubr.f32.mxu0 0.0
  %914 = vmatmul.mubr.f32.gmra.mrb[0].mxu0 %v839
  %v915 = vpop.f32.mrb[0].mxu0
  %v916 = vadd.f32 0.0, %v915
  %v917 = vpop.f32.mrb[0].mxu0
  %918 = vmatprep.mubr.f32.mxu0 0.0
  %919 = vmatmul.mubr.f32.gmra.mrb[0].mxu0 %v842
  %v920 = vpop.f32.mrb[0].mxu0
  %v921 = vadd.f32 0.0, %v920
  %v922 = vpop.f32.mrb[0].mxu0
  %923 = vdwg.mxu0
  %v924 = vmul.f32 %v714, %v911
  %v925 = vmul.f32 %v719, %v916
  %v926 = vmul.f32 %v724, %v921
  %v927 = vadd.f32 %v924, %v619
  %v928 = vadd.f32 %v925, %v620
  %v929 = vadd.f32 %v926, %v621
  %s930 = scalar_lea.vmem %s7, 48
  %931 = vst.msk [vmem:[%s930] sm:$0xff] %vm572, %v927
  %932 = vst.msk [vmem:[%s930 + $0x8] sm:$0xff] %vm572, %v928
  %933 = vst.msk [vmem:[%s930 + $0x10] sm:$0xf] %vm734, %v929
  %v935 = vsel %vm133, %v501, 0
  %v938 = vsel %vm133, %v502, 0
  %v941 = vsel %vm133, %v503, 0
  %943 = vmatprep.subr.mxu0 0.0
  %944 = vmatpush1.msra.mxu0 %v564
  %945 = vmatprep.subr.mxu0 0.0
  %946 = vmatpush1.msra.mxu0 %v565
  %947 = vmatprep.subr.mxu0 0.0
  %948 = vmatpush1.msra.mxu0 %v566
  %949 = vmatprep.subr.mxu0 0.0
  %950 = vmatpush1.msra.mxu0 %v567
  %951 = vmatprep.subr.mxu0 0.0
  %952 = vmatpush1.msra.mxu0 %v568
  %953 = vmatprep.subr.mxu0 0.0
  %954 = vmatpush1.msra.mxu0 %v569
  %955 = vmatprep.subr.mxu0 0.0
  %956 = vmatpush1.msra.mxu0 %v570
  %957 = vmatprep.subr.mxu0 0.0
  %958 = vmatpush1.msra.mxu0 %v571
  %959 = vmatprep.subr.mxu0 0.0
  %960 = vmatpush1.msra.mxu0 0.0
  %961 = vmatprep.subr.mxu0 0.0
  %962 = vmatpush1.msra.mxu0 0.0
  %963 = vmatprep.subr.mxu0 0.0
  %964 = vmatpush1.msra.mxu0 0.0
  %965 = vmatprep.subr.mxu0 0.0
  %966 = vmatpush1.msra.mxu0 0.0
  %967 = vmatprep.subr.mxu0 0.0
  %968 = vmatpush1.msra.mxu0 0.0
  %969 = vmatprep.subr.mxu0 0.0
  %970 = vmatpush1.msra.mxu0 0.0
  %971 = vmatprep.subr.mxu0 0.0
  %972 = vmatpush1.msra.mxu0 0.0
  %973 = vmatprep.subr.mxu0 0.0
  %974 = vmatpush1.msra.mxu0 0.0
  %975 = vmatprep.subr.mxu0 0.0
  %976 = vmatpush1.msra.mxu0 0.0
  %977 = vmatprep.subr.mxu0 0.0
  %978 = vmatpush1.msra.mxu0 0.0
  %979 = vmatprep.subr.mxu0 0.0
  %980 = vmatpush1.msra.mxu0 0.0
  %981 = vmatprep.subr.mxu0 0.0
  %982 = vmatpush1.msra.mxu0 0.0
  %983 = vmatprep.subr.mxu0 0.0
  %984 = vmatpush1.msra.mxu0 0.0
  %985 = vmatprep.subr.mxu0 0.0
  %986 = vmatpush1.msra.mxu0 0.0
  %987 = vmatprep.subr.mxu0 0.0
  %988 = vmatpush1.msra.mxu0 0.0
  %989 = vmatprep.subr.mxu0 0.0
  %990 = vmatpush1.msra.mxu0 0.0
  %991 = vmatprep.subr.mxu0 0.0
  %992 = vmatpush1.msra.mxu0 0.0
  %993 = vmatprep.subr.mxu0 0.0
  %994 = vmatpush1.msra.mxu0 0.0
  %995 = vmatprep.subr.mxu0 0.0
  %996 = vmatpush1.msra.mxu0 0.0
  %997 = vmatprep.subr.mxu0 0.0
  %998 = vmatpush1.msra.mxu0 0.0
  %999 = vmatprep.subr.mxu0 0.0
  %1000 = vmatpush1.msra.mxu0 0.0
  %1001 = vmatprep.subr.mxu0 0.0
  %1002 = vmatpush1.msra.mxu0 0.0
  %1003 = vmatprep.subr.mxu0 0.0
  %1004 = vmatpush1.msra.mxu0 0.0
  %1005 = vmatprep.subr.mxu0 0.0
  %1006 = vmatpush1.msra.mxu0 0.0
  %1007 = vmatprep.mubr.f32.mxu0 0.0
  %1008 = vmatmul.mubr.f32.gmra.mrb[0].mxu0 %v935
  %v1009 = vpop.f32.mrb[0].mxu0
  %v1010 = vadd.f32 0.0, %v1009
  %v1011 = vpop.f32.mrb[0].mxu0
  %1012 = vmatprep.mubr.f32.mxu0 0.0
  %1013 = vmatmul.mubr.f32.gmra.mrb[0].mxu0 %v938
  %v1014 = vpop.f32.mrb[0].mxu0
  %v1015 = vadd.f32 0.0, %v1014
  %v1016 = vpop.f32.mrb[0].mxu0
  %1017 = vmatprep.mubr.f32.mxu0 0.0
  %1018 = vmatmul.mubr.f32.gmra.mrb[0].mxu0 %v941
  %v1019 = vpop.f32.mrb[0].mxu0
  %v1020 = vadd.f32 0.0, %v1019
  %v1021 = vpop.f32.mrb[0].mxu0
  %1022 = vdwg.mxu0
  %v1023 = vmul.f32 %v714, %v1010
  %v1024 = vmul.f32 %v719, %v1015
  %v1025 = vmul.f32 %v724, %v1020
  %v1026 = vadd.f32 %v1023, %v619
  %v1027 = vadd.f32 %v1024, %v620
  %v1028 = vadd.f32 %v1025, %v621
  %s1029 = scalar_lea.vmem %s7, 72
  %1030 = vst.msk [vmem:[%s1029] sm:$0xff] %vm572, %v1026
  %1031 = vst.msk [vmem:[%s1029 + $0x8] sm:$0xff] %vm572, %v1027
  %1032 = vst.msk [vmem:[%s1029 + $0x10] sm:$0xf] %vm734, %v1028
  // Predicated region
  $region30: #{tpu_custom_call.1} parent=0 // pred_check
    _
  $region31: #{tpu_custom_call.1} parent=0 // pred_check_branch
    %1034 = sbr.rel (0) target = $region33
  $region32: #{tpu_custom_call.1} parent=0 // pred_region
    _
  $region33: #{tpu_custom_call.1} parent=0 // pred_fallthru
    _
  // Predicated region
  $region34: #{tpu_custom_call.1} parent=0 // pred_check
    _
  $region35: #{tpu_custom_call.1} parent=0 // pred_check_branch
    %1036 = sbr.rel (0) target = $region37
  $region36: #{tpu_custom_call.1} parent=0 // pred_region
    _
  $region37: #{tpu_custom_call.1} parent=0 // pred_fallthru
    _

</llo_original>
